<compile_context>
chip_gen: v7x
topology: tpu7x:2x2x1
jax: 0.10.0
libtpu: 0.0.40
codegen_flags: <defaults>
</compile_context>

<pallas_src>
import jax
import jax.numpy as jnp
from jax.experimental import pallas as pl
from jax.experimental.pallas import tpu as pltpu


# ----------------------------- Slab layout --------------------------------- #

def _align8(r):
    return (r + 7) // 8 * 8


def make_slab_layout(n, f, hidden, g):
    """Row offsets of each packed operand inside the static (rows, width) f32
    slab.  Every segment starts on an 8-row (f32 sublane-tile) boundary so the
    in-kernel static slices never straddle an (8,128) tile."""
    width = max(n, hidden)
    offs = {}
    r = 0
    for name, rows in (("a_hat", n), ("w1", f), ("b1", 1), ("w2", hidden),
                       ("b2", 1), ("wo", n), ("pool", g)):
        offs[name] = r
        r = _align8(r + rows)
    return offs, r, width


# ----------------------------- Pallas kernel ------------------------------- #

def make_fused_kernel(n, f, hidden, g, offs):
    a0 = offs["a_hat"]; w10 = offs["w1"]; b10 = offs["b1"]
    w20 = offs["w2"];   b20 = offs["b2"]; wo0 = offs["wo"]; p0 = offs["pool"]

    def kernel(slab_ref, x_ref, bo_ref, o_ref):
        """Entire AdamsGCN forward, all operands VMEM-resident.

        slab_ref : (rows, width) packed f32 slab holding
                     a_hat (N,N), w1 (F,H), b1 (1,H), w2 (H,H), b2 (1,H),
                     wo (N,H) row-aligned tiled out-weight, pool (G,N).
        x_ref    : (N, F) node features (the only per-call tensor input)
        bo_ref   : (1, 1) out-layer bias, in SMEM
        o_ref    : (G, 1) output
        """
        # Static carves out of the single packed slab (8-row-aligned starts).
        a    = slab_ref[a0:a0 + n,        0:n]
        w1   = slab_ref[w10:w10 + f,      0:hidden]
        b1   = slab_ref[b10:b10 + 1,      0:hidden]
        w2   = slab_ref[w20:w20 + hidden, 0:hidden]
        b2   = slab_ref[b20:b20 + 1,      0:hidden]
        wo   = slab_ref[wo0:wo0 + n,      0:hidden]
        pool = slab_ref[p0:p0 + g,        0:n]

        x = x_ref[...]

        # gconv1 -> relu, reassociated (F << H): relu((A_hat @ X) @ W1 + b1)
        ax = jnp.dot(a, x, preferred_element_type=jnp.float32)
        h = jnp.maximum(
            jnp.dot(ax, w1, preferred_element_type=jnp.float32) + b1, 0.0)

        # gconv2 -> relu: relu(A_hat @ (H @ W2) + b2)
        hw = jnp.dot(h, w2, preferred_element_type=jnp.float32)
        h = jnp.maximum(
            jnp.dot(a, hw, preferred_element_type=jnp.float32) + b2, 0.0)

        # reshape [N,H] -> [G, S*H] + out Linear, folded:
        #   out[g] = sum_{s,h} H2[g*S+s, h] * W_out[s*H+h] + b_out
        # = per-row dot against the row-aligned tiled weight (VPU mul + XLU
        #   reduce, off the MXU path) followed by a tiny pooling matmul.
        row_dot = jnp.sum(h * wo, axis=1, keepdims=True)            # (N, 1)
        o_ref[...] = (
            jnp.dot(pool, row_dot, preferred_element_type=jnp.float32)
            + bo_ref[0, 0])

    return kernel


# ------------------------------ Wrapper ------------------------------------ #

def build_adams_gcn(n, f, hidden, g):
    """Returns (jitted forward(slab, x, b_out) -> (G,1), slab layout)."""
    layout = make_slab_layout(n, f, hidden, g)
    offs, _rows, _width = layout
    kernel = make_fused_kernel(n, f, hidden, g, offs)

    vmem = pl.BlockSpec(memory_space=pltpu.MemorySpace.VMEM)
    smem = pl.BlockSpec(memory_space=pltpu.MemorySpace.SMEM)

    @jax.jit
    def forward(slab, x, b_out):
        return pl.pallas_call(
            kernel,
            out_shape=jax.ShapeDtypeStruct((g, 1), jnp.float32),
            in_specs=[vmem,   # packed slab (a_hat, weights, biases, wo, pool)
                      vmem,   # x
                      smem],  # b_out (scalar)
            out_specs=vmem,
            # Explicit scoped-VMEM limit: safe headroom on all gens; on v7x
            # (64 MiB physical) the scaling path is to row-tile a_hat with an
            # "arbitrary" reduction axis once N^2*4B nears ~half this limit.
            compiler_params=pltpu.CompilerParams(
                vmem_limit_bytes=32 * 1024 * 1024),
        )(slab, x, b_out)

    return forward, layout


def pack_static_slab(params, a_hat, pool, size_subgraph, layout):
    """Built ONCE per (params, topology); reused across forwards."""
    offs, rows, width = layout
    hidden = params["w1"].shape[1]
    g = pool.shape[0]
    # Fold the row-major [N,H] -> [G, S*H] reshape into the out-Linear by
    # presenting w_out (S*H, 1) as an (N, H) tile aligned with H2's rows.
    w_out_tiled = jnp.tile(
        params["w_out"].reshape(size_subgraph, hidden), (g, 1))
    slab = jnp.zeros((rows, width), jnp.float32)
    for name, arr in (("a_hat", a_hat), ("w1", params["w1"]),
                      ("b1", params["b1"]), ("w2", params["w2"]),
                      ("b2", params["b2"]), ("wo", w_out_tiled),
                      ("pool", pool)):
        r = offs[name]
        slab = slab.at[r:r + arr.shape[0], 0:arr.shape[1]].set(arr)
    return slab


# ---------------------- Topology preprocessing (plain JAX) ------------------ #

def normalized_adjacency(edge_index, num_nodes):
    """A_hat = D^{-1/2}(A + I)D^{-1/2}, matching PyG GCNConv's gcn_norm for a
    simple unweighted graph with no pre-existing self-loops and no duplicate
    edges.  Computed once per topology and cached by the caller."""
    src = edge_index[0]
    dst = edge_index[1]
    a = jnp.zeros((num_nodes, num_nodes), jnp.float32)
    # message flows src -> dst, aggregated at dst  =>  A_hat[dst, src]
    a = a.at[dst, src].add(1.0)
    a = a + jnp.eye(num_nodes, dtype=jnp.float32)
    deg = a.sum(axis=1)
    dinv = jnp.where(deg > 0, 1.0 / jnp.sqrt(deg), 0.0)
    return dinv[:, None] * a * dinv[None, :]


def graph_pooling_matrix(num_graphs, size_subgraph):
    """pool[g, n] = 1.0 iff node n belongs to subgraph g (row-major grouping)."""
    node_group = (jnp.arange(num_graphs * size_subgraph, dtype=jnp.int32)
                  // size_subgraph)
    group = jnp.arange(num_graphs, dtype=jnp.int32)
    return (node_group[None, :] == group[:, None]).astype(jnp.float32)


def init_params(key, num_node_features, hidden, size_subgraph):
    ks = jax.random.split(key, 6)
    flat = hidden * size_subgraph
    scale = 0.1
    return {
        "w1": scale * jax.random.normal(ks[0], (num_node_features, hidden), jnp.float32),
        "b1": scale * jax.random.normal(ks[1], (1, hidden), jnp.float32),
        "w2": scale * jax.random.normal(ks[2], (hidden, hidden), jnp.float32),
        "b2": scale * jax.random.normal(ks[3], (1, hidden), jnp.float32),
        "w_out": scale * jax.random.normal(ks[4], (flat, 1), jnp.float32),
        "b_out": scale * jax.random.normal(ks[5], (1, 1), jnp.float32),
    }


# Pure-JAX reference of the module forward, for a correctness check.
def reference_forward(params, x, a_hat, num_graphs, size_subgraph):
    hidden = params["w1"].shape[1]
    h = jnp.maximum(a_hat @ (x @ params["w1"]) + params["b1"], 0.0)
    h = jnp.maximum(a_hat @ (h @ params["w2"]) + params["b2"], 0.0)
    h = h.reshape(num_graphs, size_subgraph * hidden)
    return h @ params["w_out"] + params["b_out"]


# --------------------------------- Main ------------------------------------ #

if __name__ == "__main__":
    num_node_features = 4
    hidden = 32            # hyperparams['num_hidden_features']
    size_subgraph = 8      # hyperparams['size_subgraph_samples']
    num_graphs = 2
    n_nodes = num_graphs * size_subgraph  # 16

    key = jax.random.PRNGKey(0)
    k_x, k_p = jax.random.split(key)

    x = jax.random.normal(k_x, (n_nodes, num_node_features), jnp.float32)

    # Undirected ring within each subgraph (both edge directions), COO [2, E].
    src_list, dst_list = [], []
    for g in range(num_graphs):
        base = g * size_subgraph
        for i in range(size_subgraph):
            a = base + i
            b = base + (i + 1) % size_subgraph
            src_list += [a, b]
            dst_list += [b, a]
    edge_index = jnp.array([src_list, dst_list], dtype=jnp.int32)

    params = init_params(k_p, num_node_features, hidden, size_subgraph)

    # One-time, per-(params, topology) preprocessing — hoisted out of the
    # jitted per-call forward.
    a_hat = normalized_adjacency(edge_index, n_nodes)
    pool = graph_pooling_matrix(num_graphs, size_subgraph)

    fwd, layout = build_adams_gcn(n_nodes, num_node_features, hidden, num_graphs)
    slab = jax.block_until_ready(
        pack_static_slab(params, a_hat, pool, size_subgraph, layout))

    out = fwd(slab, x, params["b_out"])
    out = jax.block_until_ready(out)
    assert out.shape == (num_graphs, 1), out.shape

    ref = reference_forward(params, x, a_hat, num_graphs, size_subgraph)
    assert jnp.allclose(out, ref, rtol=1e-4, atol=1e-4), (out, ref)

    print("KERNEL_OK")
</pallas_src>

<mosaic_0001>
module attributes {stable_mosaic.version = 11 : i64} {
  func.func @kernel(%arg0: memref<96x32xf32, #tpu.memory_space<vmem>>, %arg1: memref<16x4xf32, #tpu.memory_space<vmem>>, %arg2: memref<1x1xf32, #tpu.memory_space<smem>>, %arg3: memref<2x1xf32, #tpu.memory_space<vmem>>) attributes {dimension_semantics = [], scalar_prefetch = 0 : i64, scratch_operands = 0 : i64, tpu.core_type = #tpu.core_type<tc>} {
    %c0 = arith.constant 0 : index
    %c0_0 = arith.constant 0 : index
    %0 = vector.load %arg0[%c0, %c0_0] : memref<96x32xf32, #tpu.memory_space<vmem>>, vector<16x16xf32>
    %c16 = arith.constant 16 : index
    %c0_1 = arith.constant 0 : index
    %1 = vector.load %arg0[%c16, %c0_1] : memref<96x32xf32, #tpu.memory_space<vmem>>, vector<4x32xf32>
    %c24 = arith.constant 24 : index
    %c0_2 = arith.constant 0 : index
    %2 = vector.load %arg0[%c24, %c0_2] : memref<96x32xf32, #tpu.memory_space<vmem>>, vector<1x32xf32>
    %c32 = arith.constant 32 : index
    %c0_3 = arith.constant 0 : index
    %3 = vector.load %arg0[%c32, %c0_3] : memref<96x32xf32, #tpu.memory_space<vmem>>, vector<32x32xf32>
    %c64 = arith.constant 64 : index
    %c0_4 = arith.constant 0 : index
    %4 = vector.load %arg0[%c64, %c0_4] : memref<96x32xf32, #tpu.memory_space<vmem>>, vector<1x32xf32>
    %c72 = arith.constant 72 : index
    %c0_5 = arith.constant 0 : index
    %5 = vector.load %arg0[%c72, %c0_5] : memref<96x32xf32, #tpu.memory_space<vmem>>, vector<16x32xf32>
    %c88 = arith.constant 88 : index
    %c0_6 = arith.constant 0 : index
    %6 = vector.load %arg0[%c88, %c0_6] : memref<96x32xf32, #tpu.memory_space<vmem>>, vector<2x16xf32>
    %c0_7 = arith.constant 0 : index
    %c0_8 = arith.constant 0 : index
    %7 = vector.load %arg1[%c0_7, %c0_8] : memref<16x4xf32, #tpu.memory_space<vmem>>, vector<16x4xf32>
    %cst = arith.constant dense<0.000000e+00> : vector<16x4xf32>
    %8 = tpu.matmul %0, %7, %cst {dimension_numbers = #tpu.dot_dimension_numbers<[1], [0], [0], [1], [0, 0, 1, 1], [], []>} : vector<16x16xf32>, vector<16x4xf32>, vector<16x4xf32> -> vector<16x4xf32>
    %cst_9 = arith.constant dense<0.000000e+00> : vector<16x32xf32>
    %9 = tpu.matmul %8, %1, %cst_9 {dimension_numbers = #tpu.dot_dimension_numbers<[1], [0], [0], [1], [0, 0, 1, 1], [], []>} : vector<16x4xf32>, vector<4x32xf32>, vector<16x32xf32> -> vector<16x32xf32>
    %10 = vector.broadcast %2 : vector<1x32xf32> to vector<16x32xf32>
    %11 = arith.addf %9, %10 : vector<16x32xf32>
    %cst_10 = arith.constant 0.000000e+00 : f32
    %12 = vector.broadcast %cst_10 : f32 to vector<16x32xf32>
    %13 = arith.maximumf %11, %12 : vector<16x32xf32>
    %cst_11 = arith.constant dense<0.000000e+00> : vector<16x32xf32>
    %14 = tpu.matmul %13, %3, %cst_11 {dimension_numbers = #tpu.dot_dimension_numbers<[1], [0], [0], [1], [0, 0, 1, 1], [], []>} : vector<16x32xf32>, vector<32x32xf32>, vector<16x32xf32> -> vector<16x32xf32>
    %cst_12 = arith.constant dense<0.000000e+00> : vector<16x32xf32>
    %15 = tpu.matmul %0, %14, %cst_12 {dimension_numbers = #tpu.dot_dimension_numbers<[1], [0], [0], [1], [0, 0, 1, 1], [], []>} : vector<16x16xf32>, vector<16x32xf32>, vector<16x32xf32> -> vector<16x32xf32>
    %16 = vector.broadcast %4 : vector<1x32xf32> to vector<16x32xf32>
    %17 = arith.addf %15, %16 : vector<16x32xf32>
    %cst_13 = arith.constant 0.000000e+00 : f32
    %18 = vector.broadcast %cst_13 : f32 to vector<16x32xf32>
    %19 = arith.maximumf %17, %18 : vector<16x32xf32>
    %20 = arith.mulf %19, %5 : vector<16x32xf32>
    %cst_14 = arith.constant dense<0.000000e+00> : vector<16xf32>
    %21 = vector.multi_reduction <add>, %20, %cst_14 [1] : vector<16x32xf32> to vector<16xf32>
    %22 = vector.shape_cast %21 : vector<16xf32> to vector<16x1xf32>
    %cst_15 = arith.constant dense<0.000000e+00> : vector<2x1xf32>
    %23 = tpu.matmul %6, %22, %cst_15 {dimension_numbers = #tpu.dot_dimension_numbers<[1], [0], [0], [1], [0, 0, 1, 1], [], []>} : vector<2x16xf32>, vector<16x1xf32>, vector<2x1xf32> -> vector<2x1xf32>
    %c0_16 = arith.constant 0 : index
    %c0_17 = arith.constant 0 : index
    %24 = memref.load %arg2[%c0_16, %c0_17] : memref<1x1xf32, #tpu.memory_space<smem>>
    %25 = vector.broadcast %24 : f32 to vector<2x1xf32>
    %26 = arith.addf %23, %25 : vector<2x1xf32>
    %c0_18 = arith.constant 0 : index
    %c0_19 = arith.constant 0 : index
    %27 = vector.load %arg3[%c0_18, %c0_19] : memref<2x1xf32, #tpu.memory_space<vmem>>, vector<2x1xf32>
    tpu.vector_store %arg3[%c0_18, %c0_19], %26 {strides = array<i32>} : memref<2x1xf32, #tpu.memory_space<vmem>>, vector<2x1xf32>,
    return
  }
}

</mosaic_0001>

<llo_original>
// kernel: forward.1
$region0: #{forward.1}
  #allocation0 [shape = 'u32[]', space=smem, size = 0x4, offset = 0x4, fixed_abs, tag = 'smem constant byte address 0x4 - core index']
  #allocation1 [shape = 'u32[144,128]{1,0:T(1,128)}', space=vmem, size = 0x12000, scoped, tag = 'internal scratch']
  #allocation2 [shape = 'f32[1,1]{1,0:T(1,128)S(6)}', space=smem, size = 0x200, scoped, tag = 'scoped memory for forward.1']
  %s0 = inlined_call_operand.vmem [shape: f32[96,32], index: 0, kind: input, shape index: {}]
  %s1 = inlined_call_operand.vmem [shape: f32[16,4], index: 1, kind: input, shape index: {}]
  %s2 = inlined_call_operand.<no memory space> [shape: f32[1,1], index: 2, kind: input, shape index: {}]
  %s3 = inlined_call_operand.vmem [shape: f32[2,1], index: 3, kind: output, shape index: {}]
  %s4 = sld [smem:[#allocation0]]
  $region22: #{forward.1} parent=0
    _
  %s6 = ssub.s32 1, %s4
  %s7 = scalar_select 0, %s6, %s4
  %8 = sst [smem:[#allocation2]] %s2
  // Predicated region
  $region2: #{forward.1} parent=0 // pred_check
    _
  $region3: #{forward.1} parent=0 // pred_check_branch
    %10 = sbr.rel (0) target = $region5
  $region4: #{forward.1} parent=0 // pred_region
    _
  $region5: #{forward.1} parent=0 // pred_fallthru
    _
  // Predicated region
  $region6: #{forward.1} parent=0 // pred_check
    _
  $region7: #{forward.1} parent=0 // pred_check_branch
    %12 = sbr.rel (0) target = $region9
  $region8: #{forward.1} parent=0 // pred_region
    _
  $region9: #{forward.1} parent=0 // pred_fallthru
    _
  // Predicated region
  $region10: #{forward.1} parent=0 // pred_check
    _
  $region11: #{forward.1} parent=0 // pred_check_branch
    %14 = sbr.rel (0) target = $region13
  $region12: #{forward.1} parent=0 // pred_region
    _
  $region13: #{forward.1} parent=0 // pred_fallthru
    _
  %v15 = vld [vmem:[%s0] sm:$0xff]
  %v16 = vld [vmem:[%s0 + $0x8] sm:$0xff]
  %v17 = vld [vmem:[%s0 + $0x10] sm:$0xf]
  %v18 = vld [vmem:[%s0 + $0x18] sm:$0x1]
  %v19 = vld [vmem:[%s0 + $0x20] sm:$0xff]
  %v20 = vld [vmem:[%s0 + $0x28] sm:$0xff]
  %v21 = vld [vmem:[%s0 + $0x30] sm:$0xff]
  %v22 = vld [vmem:[%s0 + $0x38] sm:$0xff]
  %v23 = vld [vmem:[%s0 + $0x40] sm:$0x1]
  %v24 = vld [vmem:[%s0 + $0x48] sm:$0xff]
  %v25 = vld [vmem:[%s0 + $0x50] sm:$0xff]
  %v26 = vld [vmem:[%s0 + $0x58] sm:$0x3]
  %v27 = vld [vmem:[%s1] sm:$0xff]
  %v28 = vld [vmem:[%s1 + $0x8] sm:$0xff]
  %vm29 = vcmask 130048
  %v31 = vsel %vm29, %v15, 0
  %v34 = vsel %vm29, %v16, 0
  %36 = vmatprep.subr.mxu0 0.0
  %37 = vmatpush1.msra.mxu0 %v27
  %38 = vmatprep.subr.mxu0 0.0
  %39 = vmatpush1.msra.mxu0 %v28
  %40 = vmatprep.subr.mxu0 0.0
  %41 = vmatpush1.msra.mxu0 0.0
  %42 = vmatprep.subr.mxu0 0.0
  %43 = vmatpush1.msra.mxu0 0.0
  %44 = vmatprep.subr.mxu0 0.0
  %45 = vmatpush1.msra.mxu0 0.0
  %46 = vmatprep.subr.mxu0 0.0
  %47 = vmatpush1.msra.mxu0 0.0
  %48 = vmatprep.subr.mxu0 0.0
  %49 = vmatpush1.msra.mxu0 0.0
  %50 = vmatprep.subr.mxu0 0.0
  %51 = vmatpush1.msra.mxu0 0.0
  %52 = vmatprep.subr.mxu0 0.0
  %53 = vmatpush1.msra.mxu0 0.0
  %54 = vmatprep.subr.mxu0 0.0
  %55 = vmatpush1.msra.mxu0 0.0
  %56 = vmatprep.subr.mxu0 0.0
  %57 = vmatpush1.msra.mxu0 0.0
  %58 = vmatprep.subr.mxu0 0.0
  %59 = vmatpush1.msra.mxu0 0.0
  %60 = vmatprep.subr.mxu0 0.0
  %61 = vmatpush1.msra.mxu0 0.0
  %62 = vmatprep.subr.mxu0 0.0
  %63 = vmatpush1.msra.mxu0 0.0
  %64 = vmatprep.subr.mxu0 0.0
  %65 = vmatpush1.msra.mxu0 0.0
  %66 = vmatprep.subr.mxu0 0.0
  %67 = vmatpush1.msra.mxu0 0.0
  %68 = vmatprep.subr.mxu0 0.0
  %69 = vmatpush1.msra.mxu0 0.0
  %70 = vmatprep.subr.mxu0 0.0
  %71 = vmatpush1.msra.mxu0 0.0
  %72 = vmatprep.subr.mxu0 0.0
  %73 = vmatpush1.msra.mxu0 0.0
  %74 = vmatprep.subr.mxu0 0.0
  %75 = vmatpush1.msra.mxu0 0.0
  %76 = vmatprep.subr.mxu0 0.0
  %77 = vmatpush1.msra.mxu0 0.0
  %78 = vmatprep.subr.mxu0 0.0
  %79 = vmatpush1.msra.mxu0 0.0
  %80 = vmatprep.subr.mxu0 0.0
  %81 = vmatpush1.msra.mxu0 0.0
  %82 = vmatprep.subr.mxu0 0.0
  %83 = vmatpush1.msra.mxu0 0.0
  %84 = vmatprep.subr.mxu0 0.0
  %85 = vmatpush1.msra.mxu0 0.0
  %86 = vmatprep.subr.mxu0 0.0
  %87 = vmatpush1.msra.mxu0 0.0
  %88 = vmatprep.subr.mxu0 0.0
  %89 = vmatpush1.msra.mxu0 0.0
  %90 = vmatprep.subr.mxu0 0.0
  %91 = vmatpush1.msra.mxu0 0.0
  %92 = vmatprep.subr.mxu0 0.0
  %93 = vmatpush1.msra.mxu0 0.0
  %94 = vmatprep.subr.mxu0 0.0
  %95 = vmatpush1.msra.mxu0 0.0
  %96 = vmatprep.subr.mxu0 0.0
  %97 = vmatpush1.msra.mxu0 0.0
  %98 = vmatprep.subr.mxu0 0.0
  %99 = vmatpush1.msra.mxu0 0.0
  %100 = vmatprep.mubr.f32.mxu0 0.0
  %101 = vmatmul.mubr.f32.gmra.mrb[0].mxu0 %v31
  %v102 = vpop.f32.mrb[0].mxu0
  %v103 = vadd.f32 0.0, %v102
  %v104 = vpop.f32.mrb[0].mxu0
  %105 = vmatprep.mubr.f32.mxu0 0.0
  %106 = vmatmul.mubr.f32.gmra.mrb[0].mxu0 %v34
  %v107 = vpop.f32.mrb[0].mxu0
  %v108 = vadd.f32 0.0, %v107
  %v109 = vpop.f32.mrb[0].mxu0
  %110 = vdwg.mxu0
  %v111 = vlaneseq
  %v112 = vshrl.u32 %v111, 7
  %v113 = vsub.s32 0, %v112
  %v114 = vrot.slane %v18, %v113
  %vm115 = vcmask 31744
  %v117 = vsel %vm115, %v103, 0
  %v120 = vsel %vm115, %v108, 0
  %vm122 = vcmask 1043456
  %v124 = vsel %vm122, %v17, 0
  %126 = vmatprep.subr.mxu0 0.0
  %127 = vmatpush1.msra.mxu0 %v124
  %128 = vmatprep.subr.mxu0 0.0
  %129 = vmatpush1.msra.mxu0 0.0
  %130 = vmatprep.subr.mxu0 0.0
  %131 = vmatpush1.msra.mxu0 0.0
  %132 = vmatprep.subr.mxu0 0.0
  %133 = vmatpush1.msra.mxu0 0.0
  %134 = vmatprep.subr.mxu0 0.0
  %135 = vmatpush1.msra.mxu0 0.0
  %136 = vmatprep.subr.mxu0 0.0
  %137 = vmatpush1.msra.mxu0 0.0
  %138 = vmatprep.subr.mxu0 0.0
  %139 = vmatpush1.msra.mxu0 0.0
  %140 = vmatprep.subr.mxu0 0.0
  %141 = vmatpush1.msra.mxu0 0.0
  %142 = vmatprep.subr.mxu0 0.0
  %143 = vmatpush1.msra.mxu0 0.0
  %144 = vmatprep.subr.mxu0 0.0
  %145 = vmatpush1.msra.mxu0 0.0
  %146 = vmatprep.subr.mxu0 0.0
  %147 = vmatpush1.msra.mxu0 0.0
  %148 = vmatprep.subr.mxu0 0.0
  %149 = vmatpush1.msra.mxu0 0.0
  %150 = vmatprep.subr.mxu0 0.0
  %151 = vmatpush1.msra.mxu0 0.0
  %152 = vmatprep.subr.mxu0 0.0
  %153 = vmatpush1.msra.mxu0 0.0
  %154 = vmatprep.subr.mxu0 0.0
  %155 = vmatpush1.msra.mxu0 0.0
  %156 = vmatprep.subr.mxu0 0.0
  %157 = vmatpush1.msra.mxu0 0.0
  %158 = vmatprep.subr.mxu0 0.0
  %159 = vmatpush1.msra.mxu0 0.0
  %160 = vmatprep.subr.mxu0 0.0
  %161 = vmatpush1.msra.mxu0 0.0
  %162 = vmatprep.subr.mxu0 0.0
  %163 = vmatpush1.msra.mxu0 0.0
  %164 = vmatprep.subr.mxu0 0.0
  %165 = vmatpush1.msra.mxu0 0.0
  %166 = vmatprep.subr.mxu0 0.0
  %167 = vmatpush1.msra.mxu0 0.0
  %168 = vmatprep.subr.mxu0 0.0
  %169 = vmatpush1.msra.mxu0 0.0
  %170 = vmatprep.subr.mxu0 0.0
  %171 = vmatpush1.msra.mxu0 0.0
  %172 = vmatprep.subr.mxu0 0.0
  %173 = vmatpush1.msra.mxu0 0.0
  %174 = vmatprep.subr.mxu0 0.0
  %175 = vmatpush1.msra.mxu0 0.0
  %176 = vmatprep.subr.mxu0 0.0
  %177 = vmatpush1.msra.mxu0 0.0
  %178 = vmatprep.subr.mxu0 0.0
  %179 = vmatpush1.msra.mxu0 0.0
  %180 = vmatprep.subr.mxu0 0.0
  %181 = vmatpush1.msra.mxu0 0.0
  %182 = vmatprep.subr.mxu0 0.0
  %183 = vmatpush1.msra.mxu0 0.0
  %184 = vmatprep.subr.mxu0 0.0
  %185 = vmatpush1.msra.mxu0 0.0
  %186 = vmatprep.subr.mxu0 0.0
  %187 = vmatpush1.msra.mxu0 0.0
  %188 = vmatprep.subr.mxu0 0.0
  %189 = vmatpush1.msra.mxu0 0.0
  %190 = vmatprep.mubr.f32.mxu0 0.0
  %191 = vmatmul.mubr.f32.gmra.mrb[0].mxu0 %v117
  %v192 = vpop.f32.mrb[0].mxu0
  %v193 = vadd.f32 %v114, %v192
  %v194 = vpop.f32.mrb[0].mxu0
  %195 = vmatprep.mubr.f32.mxu0 0.0
  %196 = vmatmul.mubr.f32.gmra.mrb[0].mxu0 %v120
  %v197 = vpop.f32.mrb[0].mxu0
  %v198 = vadd.f32 %v114, %v197
  %v199 = vpop.f32.mrb[0].mxu0
  %200 = vdwg.mxu0
  %v201 = vmax.f32 %v193, 0.0
  %v202 = vmax.f32 %v198, 0.0
  %vm203 = vcmask 261120
  %v205 = vsel %vm203, %v201, 0
  %v208 = vsel %vm203, %v202, 0
  %210 = vmatprep.subr.mxu0 0.0
  %211 = vmatpush1.msra.mxu0 %v19
  %212 = vmatprep.subr.mxu0 0.0
  %213 = vmatpush1.msra.mxu0 %v20
  %214 = vmatprep.subr.mxu0 0.0
  %215 = vmatpush1.msra.mxu0 %v21
  %216 = vmatprep.subr.mxu0 0.0
  %217 = vmatpush1.msra.mxu0 %v22
  %218 = vmatprep.subr.mxu0 0.0
  %219 = vmatpush1.msra.mxu0 0.0
  %220 = vmatprep.subr.mxu0 0.0
  %221 = vmatpush1.msra.mxu0 0.0
  %222 = vmatprep.subr.mxu0 0.0
  %223 = vmatpush1.msra.mxu0 0.0
  %224 = vmatprep.subr.mxu0 0.0
  %225 = vmatpush1.msra.mxu0 0.0
  %226 = vmatprep.subr.mxu0 0.0
  %227 = vmatpush1.msra.mxu0 0.0
  %228 = vmatprep.subr.mxu0 0.0
  %229 = vmatpush1.msra.mxu0 0.0
  %230 = vmatprep.subr.mxu0 0.0
  %231 = vmatpush1.msra.mxu0 0.0
  %232 = vmatprep.subr.mxu0 0.0
  %233 = vmatpush1.msra.mxu0 0.0
  %234 = vmatprep.subr.mxu0 0.0
  %235 = vmatpush1.msra.mxu0 0.0
  %236 = vmatprep.subr.mxu0 0.0
  %237 = vmatpush1.msra.mxu0 0.0
  %238 = vmatprep.subr.mxu0 0.0
  %239 = vmatpush1.msra.mxu0 0.0
  %240 = vmatprep.subr.mxu0 0.0
  %241 = vmatpush1.msra.mxu0 0.0
  %242 = vmatprep.subr.mxu0 0.0
  %243 = vmatpush1.msra.mxu0 0.0
  %244 = vmatprep.subr.mxu0 0.0
  %245 = vmatpush1.msra.mxu0 0.0
  %246 = vmatprep.subr.mxu0 0.0
  %247 = vmatpush1.msra.mxu0 0.0
  %248 = vmatprep.subr.mxu0 0.0
  %249 = vmatpush1.msra.mxu0 0.0
  %250 = vmatprep.subr.mxu0 0.0
  %251 = vmatpush1.msra.mxu0 0.0
  %252 = vmatprep.subr.mxu0 0.0
  %253 = vmatpush1.msra.mxu0 0.0
  %254 = vmatprep.subr.mxu0 0.0
  %255 = vmatpush1.msra.mxu0 0.0
  %256 = vmatprep.subr.mxu0 0.0
  %257 = vmatpush1.msra.mxu0 0.0
  %258 = vmatprep.subr.mxu0 0.0
  %259 = vmatpush1.msra.mxu0 0.0
  %260 = vmatprep.subr.mxu0 0.0
  %261 = vmatpush1.msra.mxu0 0.0
  %262 = vmatprep.subr.mxu0 0.0
  %263 = vmatpush1.msra.mxu0 0.0
  %264 = vmatprep.subr.mxu0 0.0
  %265 = vmatpush1.msra.mxu0 0.0
  %266 = vmatprep.subr.mxu0 0.0
  %267 = vmatpush1.msra.mxu0 0.0
  %268 = vmatprep.subr.mxu0 0.0
  %269 = vmatpush1.msra.mxu0 0.0
  %270 = vmatprep.subr.mxu0 0.0
  %271 = vmatpush1.msra.mxu0 0.0
  %272 = vmatprep.subr.mxu0 0.0
  %273 = vmatpush1.msra.mxu0 0.0
  %274 = vmatprep.mubr.f32.mxu0 0.0
  %275 = vmatmul.mubr.f32.gmra.mrb[0].mxu0 %v205
  %v276 = vpop.f32.mrb[0].mxu0
  %v277 = vadd.f32 0.0, %v276
  %v278 = vpop.f32.mrb[0].mxu0
  %279 = vmatprep.mubr.f32.mxu0 0.0
  %280 = vmatmul.mubr.f32.gmra.mrb[0].mxu0 %v208
  %v281 = vpop.f32.mrb[0].mxu0
  %v282 = vadd.f32 0.0, %v281
  %v283 = vpop.f32.mrb[0].mxu0
  %284 = vdwg.mxu0
  %v285 = vlaneseq
  %v286 = vshrl.u32 %v285, 7
  %v287 = vsub.s32 0, %v286
  %v288 = vrot.slane %v23, %v287
  %289 = vmatprep.subr.mxu0 0.0
  %290 = vmatpush1.msra.mxu0 %v277
  %291 = vmatprep.subr.mxu0 0.0
  %292 = vmatpush1.msra.mxu0 %v282
  %293 = vmatprep.subr.mxu0 0.0
  %294 = vmatpush1.msra.mxu0 0.0
  %295 = vmatprep.subr.mxu0 0.0
  %296 = vmatpush1.msra.mxu0 0.0
  %297 = vmatprep.subr.mxu0 0.0
  %298 = vmatpush1.msra.mxu0 0.0
  %299 = vmatprep.subr.mxu0 0.0
  %300 = vmatpush1.msra.mxu0 0.0
  %301 = vmatprep.subr.mxu0 0.0
  %302 = vmatpush1.msra.mxu0 0.0
  %303 = vmatprep.subr.mxu0 0.0
  %304 = vmatpush1.msra.mxu0 0.0
  %305 = vmatprep.subr.mxu0 0.0
  %306 = vmatpush1.msra.mxu0 0.0
  %307 = vmatprep.subr.mxu0 0.0
  %308 = vmatpush1.msra.mxu0 0.0
  %309 = vmatprep.subr.mxu0 0.0
  %310 = vmatpush1.msra.mxu0 0.0
  %311 = vmatprep.subr.mxu0 0.0
  %312 = vmatpush1.msra.mxu0 0.0
  %313 = vmatprep.subr.mxu0 0.0
  %314 = vmatpush1.msra.mxu0 0.0
  %315 = vmatprep.subr.mxu0 0.0
  %316 = vmatpush1.msra.mxu0 0.0
  %317 = vmatprep.subr.mxu0 0.0
  %318 = vmatpush1.msra.mxu0 0.0
  %319 = vmatprep.subr.mxu0 0.0
  %320 = vmatpush1.msra.mxu0 0.0
  %321 = vmatprep.subr.mxu0 0.0
  %322 = vmatpush1.msra.mxu0 0.0
  %323 = vmatprep.subr.mxu0 0.0
  %324 = vmatpush1.msra.mxu0 0.0
  %325 = vmatprep.subr.mxu0 0.0
  %326 = vmatpush1.msra.mxu0 0.0
  %327 = vmatprep.subr.mxu0 0.0
  %328 = vmatpush1.msra.mxu0 0.0
  %329 = vmatprep.subr.mxu0 0.0
  %330 = vmatpush1.msra.mxu0 0.0
  %331 = vmatprep.subr.mxu0 0.0
  %332 = vmatpush1.msra.mxu0 0.0
  %333 = vmatprep.subr.mxu0 0.0
  %334 = vmatpush1.msra.mxu0 0.0
  %335 = vmatprep.subr.mxu0 0.0
  %336 = vmatpush1.msra.mxu0 0.0
  %337 = vmatprep.subr.mxu0 0.0
  %338 = vmatpush1.msra.mxu0 0.0
  %339 = vmatprep.subr.mxu0 0.0
  %340 = vmatpush1.msra.mxu0 0.0
  %341 = vmatprep.subr.mxu0 0.0
  %342 = vmatpush1.msra.mxu0 0.0
  %343 = vmatprep.subr.mxu0 0.0
  %344 = vmatpush1.msra.mxu0 0.0
  %345 = vmatprep.subr.mxu0 0.0
  %346 = vmatpush1.msra.mxu0 0.0
  %347 = vmatprep.subr.mxu0 0.0
  %348 = vmatpush1.msra.mxu0 0.0
  %349 = vmatprep.subr.mxu0 0.0
  %350 = vmatpush1.msra.mxu0 0.0
  %351 = vmatprep.subr.mxu0 0.0
  %352 = vmatpush1.msra.mxu0 0.0
  %353 = vmatprep.mubr.f32.mxu0 0.0
  %354 = vmatmul.mubr.f32.gmra.mrb[0].mxu0 %v31
  %v355 = vpop.f32.mrb[0].mxu0
  %v356 = vadd.f32 %v288, %v355
  %v357 = vpop.f32.mrb[0].mxu0
  %358 = vmatprep.mubr.f32.mxu0 0.0
  %359 = vmatmul.mubr.f32.gmra.mrb[0].mxu0 %v34
  %v360 = vpop.f32.mrb[0].mxu0
  %v361 = vadd.f32 %v288, %v360
  %v362 = vpop.f32.mrb[0].mxu0
  %363 = vdwg.mxu0
  %v364 = vmax.f32 %v356, 0.0
  %v365 = vmax.f32 %v361, 0.0
  %v366 = vmul.f32 %v364, %v24
  %v367 = vmul.f32 %v365, %v25
  %v368 = vsel %vm203, %v366, 0.0
  %369 = vadd.xlane.f32.xlu0 %v368
  %v370 = vpop.xlane.xlu0 %369
  %v371 = vsel %vm203, %v367, 0.0
  %372 = vadd.xlane.f32.xlu0 %v371
  %v373 = vpop.xlane.xlu0 %372
  %s374 = sld [smem:[#allocation2]]
  %v375 = vstv %s374
  %v377 = vsel %vm29, %v26, 0
  %379 = vmatprep.subr.mxu0 0.0
  %380 = vmatpush1.msra.mxu0 %v370
  %381 = vmatprep.subr.mxu0 0.0
  %382 = vmatpush1.msra.mxu0 %v373
  %383 = vmatprep.subr.mxu0 0.0
  %384 = vmatpush1.msra.mxu0 0.0
  %385 = vmatprep.subr.mxu0 0.0
  %386 = vmatpush1.msra.mxu0 0.0
  %387 = vmatprep.subr.mxu0 0.0
  %388 = vmatpush1.msra.mxu0 0.0
  %389 = vmatprep.subr.mxu0 0.0
  %390 = vmatpush1.msra.mxu0 0.0
  %391 = vmatprep.subr.mxu0 0.0
  %392 = vmatpush1.msra.mxu0 0.0
  %393 = vmatprep.subr.mxu0 0.0
  %394 = vmatpush1.msra.mxu0 0.0
  %395 = vmatprep.subr.mxu0 0.0
  %396 = vmatpush1.msra.mxu0 0.0
  %397 = vmatprep.subr.mxu0 0.0
  %398 = vmatpush1.msra.mxu0 0.0
  %399 = vmatprep.subr.mxu0 0.0
  %400 = vmatpush1.msra.mxu0 0.0
  %401 = vmatprep.subr.mxu0 0.0
  %402 = vmatpush1.msra.mxu0 0.0
  %403 = vmatprep.subr.mxu0 0.0
  %404 = vmatpush1.msra.mxu0 0.0
  %405 = vmatprep.subr.mxu0 0.0
  %406 = vmatpush1.msra.mxu0 0.0
  %407 = vmatprep.subr.mxu0 0.0
  %408 = vmatpush1.msra.mxu0 0.0
  %409 = vmatprep.subr.mxu0 0.0
  %410 = vmatpush1.msra.mxu0 0.0
  %411 = vmatprep.subr.mxu0 0.0
  %412 = vmatpush1.msra.mxu0 0.0
  %413 = vmatprep.subr.mxu0 0.0
  %414 = vmatpush1.msra.mxu0 0.0
  %415 = vmatprep.subr.mxu0 0.0
  %416 = vmatpush1.msra.mxu0 0.0
  %417 = vmatprep.subr.mxu0 0.0
  %418 = vmatpush1.msra.mxu0 0.0
  %419 = vmatprep.subr.mxu0 0.0
  %420 = vmatpush1.msra.mxu0 0.0
  %421 = vmatprep.subr.mxu0 0.0
  %422 = vmatpush1.msra.mxu0 0.0
  %423 = vmatprep.subr.mxu0 0.0
  %424 = vmatpush1.msra.mxu0 0.0
  %425 = vmatprep.subr.mxu0 0.0
  %426 = vmatpush1.msra.mxu0 0.0
  %427 = vmatprep.subr.mxu0 0.0
  %428 = vmatpush1.msra.mxu0 0.0
  %429 = vmatprep.subr.mxu0 0.0
  %430 = vmatpush1.msra.mxu0 0.0
  %431 = vmatprep.subr.mxu0 0.0
  %432 = vmatpush1.msra.mxu0 0.0
  %433 = vmatprep.subr.mxu0 0.0
  %434 = vmatpush1.msra.mxu0 0.0
  %435 = vmatprep.subr.mxu0 0.0
  %436 = vmatpush1.msra.mxu0 0.0
  %437 = vmatprep.subr.mxu0 0.0
  %438 = vmatpush1.msra.mxu0 0.0
  %439 = vmatprep.subr.mxu0 0.0
  %440 = vmatpush1.msra.mxu0 0.0
  %441 = vmatprep.subr.mxu0 0.0
  %442 = vmatpush1.msra.mxu0 0.0
  %443 = vmatprep.mubr.f32.mxu0 0.0
  %444 = vmatmul.mubr.f32.gmra.mrb[0].mxu0 %v377
  %v445 = vpop.f32.mrb[0].mxu0
  %v446 = vadd.f32 %v375, %v445
  %v447 = vpop.f32.mrb[0].mxu0
  %448 = vdwg.mxu0
  %vm449 = vcmask 1024
  %450 = vst.msk [vmem:[%s3] sm:$0x3] %vm449, %v446
  // Predicated region
  $region14: #{forward.1} parent=0 // pred_check
    _
  $region15: #{forward.1} parent=0 // pred_check_branch
    %452 = sbr.rel (0) target = $region17
  $region16: #{forward.1} parent=0 // pred_region
    _
  $region17: #{forward.1} parent=0 // pred_fallthru
    _
  // Predicated region
  $region18: #{forward.1} parent=0 // pred_check
    _
  $region19: #{forward.1} parent=0 // pred_check_branch
    %454 = sbr.rel (0) target = $region21
  $region20: #{forward.1} parent=0 // pred_region
    _
  $region21: #{forward.1} parent=0 // pred_fallthru
    _

</llo_original>
